<compile_context>
chip_gen: v7x
topology: tpu7x:2x2x1
jax: 0.10.0
libtpu: 0.0.40
codegen_flags: <defaults>
</compile_context>

<pallas_src>
import functools

import jax
import jax.numpy as jnp
from jax.experimental import pallas as pl
from jax.experimental.pallas import tpu as pltpu


def _layernorm_kernel(alpha_ref, bias_ref, x_ref, o_ref, *, eps):
    # alpha_ref / bias_ref: shape-(1,) scalars, prefetched into SMEM once.
    # x_ref / o_ref: (TM, H) tile in VMEM.
    x = x_ref[...].astype(jnp.float32)
    n = x.shape[-1]
    mean = jnp.mean(x, axis=-1, keepdims=True)
    diff = x - mean
    # torch.std defaults to unbiased (Bessel-corrected) std: divide by N-1.
    # NOTE: H == 1 yields inf/NaN exactly like torch.std(unbiased=True).
    var = jnp.sum(diff * diff, axis=-1, keepdims=True) * (1.0 / (n - 1))
    std = jnp.sqrt(var)
    # One reciprocal per row on the (TM,1) column (EUP slot) instead of H
    # divides per row; alpha folded into the per-row scale (approx=False to
    # keep the 1e-5 tolerance).
    inv = pl.reciprocal(std + eps, approx=False)
    scale = alpha_ref[0] * inv
    o_ref[...] = (diff * scale + bias_ref[0]).astype(o_ref.dtype)


def _tpu_hw_params():
    """Return (vmem_capacity_bytes, tensorcores_per_chip) with safe fallbacks."""
    vmem_cap = 64 << 20  # v7x per-TC physical VMEM (smallest of the targets)
    cores = 1
    try:
        info = pltpu.get_tpu_info()
        cap = getattr(info, "vmem_capacity_bytes", None)
        if cap:
            vmem_cap = int(cap)
    except Exception:
        pass
    try:
        kind = jax.devices()[0].device_kind.lower()
        # 2 TensorCores per chip: v7x, and v4/v5p megacore. v5e/v6e are 1 TC.
        if ("v7" in kind) or ("7x" in kind) or ("v4" in kind) or ("v5p" in kind):
            cores = 2
    except Exception:
        pass
    return vmem_cap, cores


def _choose_row_tile(rows, h, dtype, vmem_cap, cores):
    """Row tile: as big as the byte budget allows (amortizes ~600-cycle per-step
    overhead), dtype-aware sublane rounding, min grid steps only on 2-TC chips."""
    itemsize = jnp.dtype(dtype).itemsize
    sub = max(8, 32 // itemsize)  # sublane packing: 8 f32, 16 bf16, 32 int8/fp8
    rows_pad = ((rows + sub - 1) // sub) * sub

    # Byte-only cap: bigger target where physical VMEM is bigger (v5e/v6e: 128 MiB).
    target_bytes = (8 << 20) if vmem_cap >= (96 << 20) else (4 << 20)
    rt = max(sub, target_bytes // max(h * itemsize, 1))
    rt = min(rt, rows_pad)
    rt -= rt % sub
    rt = max(rt, sub)

    if cores >= 2:
        # Multi-TC chip: keep >= 8 grid steps (when there is enough work) so the
        # "parallel" row axis shards across both cores with reasonable balance.
        min_steps = 8
        if rows_pad >= min_steps * sub:
            capped = max(sub, ((rows_pad // min_steps) // sub) * sub)
            rt = min(rt, capped)
    return rt


def layer_normalization(x, alpha, bias, eps=1e-6, row_tile=None):
    """x: (..., H). alpha, bias: shape-(1,) parameters (scalars)."""
    orig_shape = x.shape
    h = orig_shape[-1]
    x2 = x.reshape(-1, h)
    rows = x2.shape[0]

    vmem_cap, cores = _tpu_hw_params()
    if row_tile is None:
        row_tile = _choose_row_tile(rows, h, x2.dtype, vmem_cap, cores)

    # NOTE: for production H that is a multiple of 128 the lane dim is dense;
    # for tiny H (demo H=32) stores are partial-lane but still correct.
    # TODO(synk): pack 128//H rows per lane group (segmented lane reduction)
    # when H < 128 to avoid masked vst.msk partial stores.

    grid = (pl.cdiv(rows, row_tile),)

    itemsize = jnp.dtype(x2.dtype).itemsize
    # Double-buffered in + out tiles (native dtype) + f32 work copies + headroom,
    # capped 8 MiB below physical VMEM so Mosaic internal scratch always fits.
    tile_in = row_tile * h * itemsize
    tile_f32 = row_tile * h * 4
    need = 4 * tile_in + 2 * tile_f32 + (8 << 20)
    vmem_limit = int(min(max(need, 32 << 20), vmem_cap - (8 << 20)))

    cost = pl.CostEstimate(
        flops=6 * rows * h,
        transcendentals=2 * rows,            # sqrt + reciprocal per row
        bytes_accessed=2 * rows * h * itemsize,
    )

    out = pl.pallas_call(
        functools.partial(_layernorm_kernel, eps=eps),
        out_shape=jax.ShapeDtypeStruct((rows, h), x.dtype),
        grid_spec=pltpu.PrefetchScalarGridSpec(
            num_scalar_prefetch=2,           # alpha, bias -> SMEM once, before the grid
            grid=grid,
            in_specs=[
                pl.BlockSpec((row_tile, h), lambda i, alpha_ref, bias_ref: (i, 0)),
            ],
            out_specs=pl.BlockSpec((row_tile, h), lambda i, alpha_ref, bias_ref: (i, 0)),
        ),
        compiler_params=pltpu.CompilerParams(
            dimension_semantics=("parallel",),
            vmem_limit_bytes=vmem_limit,
        ),
        cost_estimate=cost,
    )(alpha, bias, x2)

    return out.reshape(orig_shape)


if __name__ == "__main__":
    key = jax.random.PRNGKey(0)
    batch, seq, hidden = 2, 8, 32
    x = jax.random.normal(key, (batch, seq, hidden), dtype=jnp.float32)

    # Deterministic parameter init matching nn.Parameter(torch.ones(1)) / zeros(1).
    alpha = jnp.ones((1,), dtype=jnp.float32)
    bias = jnp.zeros((1,), dtype=jnp.float32)

    out = layer_normalization(x, alpha, bias, eps=1e-6)
    jax.block_until_ready(out)

    # Pure-JAX reference check (unbiased std, eps added to std).
    mean = jnp.mean(x, axis=-1, keepdims=True)
    std = jnp.sqrt(jnp.sum((x - mean) ** 2, axis=-1, keepdims=True) / (hidden - 1))
    ref = alpha[0] * (x - mean) / (std + 1e-6) + bias[0]
    assert jnp.allclose(out, ref, atol=1e-5, rtol=1e-5)

    print("KERNEL_OK")
</pallas_src>

<mosaic_0001>
module attributes {stable_mosaic.version = 11 : i64} {
  func.func @_layernorm_kernel(%arg0: i32, %arg1: memref<1xf32, #tpu.memory_space<smem>>, %arg2: memref<1xf32, #tpu.memory_space<smem>>, %arg3: memref<16x32xf32, #tpu.memory_space<vmem>>, %arg4: memref<16x32xf32, #tpu.memory_space<vmem>>) attributes {dimension_semantics = [#tpu.dimension_semantics<parallel>], iteration_bounds = array<i64: 1>, scalar_prefetch = 2 : i64, scratch_operands = 0 : i64, tpu.core_type = #tpu.core_type<tc>, window_params = [{transform_indices = @transform_0, window_bounds = array<i64: 16, 32>}, {transform_indices = @transform_1, window_bounds = array<i64: 16, 32>}]} {
    %c0 = arith.constant 0 : index
    %c0_0 = arith.constant 0 : index
    %0 = vector.load %arg3[%c0, %c0_0] : memref<16x32xf32, #tpu.memory_space<vmem>>, vector<16x32xf32>
    %cst = arith.constant dense<0.000000e+00> : vector<16xf32>
    %1 = vector.multi_reduction <add>, %0, %cst [1] : vector<16x32xf32> to vector<16xf32>
    %2 = vector.shape_cast %1 : vector<16xf32> to vector<16x1xf32>
    %cst_1 = arith.constant 3.200000e+01 : f32
    %3 = vector.broadcast %cst_1 : f32 to vector<16x1xf32>
    %4 = arith.divf %2, %3 : vector<16x1xf32>
    %5 = vector.broadcast %4 : vector<16x1xf32> to vector<16x32xf32>
    %6 = arith.subf %0, %5 : vector<16x32xf32>
    %7 = arith.mulf %6, %6 : vector<16x32xf32>
    %cst_2 = arith.constant dense<0.000000e+00> : vector<16xf32>
    %8 = vector.multi_reduction <add>, %7, %cst_2 [1] : vector<16x32xf32> to vector<16xf32>
    %9 = vector.shape_cast %8 : vector<16xf32> to vector<16x1xf32>
    %cst_3 = arith.constant 0.0322580636 : f32
    %10 = vector.broadcast %cst_3 : f32 to vector<16x1xf32>
    %11 = arith.mulf %9, %10 : vector<16x1xf32>
    %12 = math.sqrt %11 : vector<16x1xf32>
    %cst_4 = arith.constant 9.99999997E-7 : f32
    %13 = vector.broadcast %cst_4 : f32 to vector<16x1xf32>
    %14 = arith.addf %12, %13 : vector<16x1xf32>
    %15 = tpu.reciprocal %14 : vector<16x1xf32> -> vector<16x1xf32>
    %c0_5 = arith.constant 0 : index
    %16 = memref.load %arg1[%c0_5] : memref<1xf32, #tpu.memory_space<smem>>
    %17 = vector.broadcast %16 : f32 to vector<16x1xf32>
    %18 = arith.mulf %17, %15 : vector<16x1xf32>
    %19 = vector.broadcast %18 : vector<16x1xf32> to vector<16x32xf32>
    %20 = arith.mulf %6, %19 : vector<16x32xf32>
    %c0_6 = arith.constant 0 : index
    %21 = memref.load %arg2[%c0_6] : memref<1xf32, #tpu.memory_space<smem>>
    %22 = vector.broadcast %21 : f32 to vector<16x32xf32>
    %23 = arith.addf %20, %22 : vector<16x32xf32>
    %c0_7 = arith.constant 0 : index
    %c0_8 = arith.constant 0 : index
    %24 = vector.load %arg4[%c0_7, %c0_8] : memref<16x32xf32, #tpu.memory_space<vmem>>, vector<16x32xf32>
    tpu.vector_store %arg4[%c0_7, %c0_8], %23 {strides = array<i32>} : memref<16x32xf32, #tpu.memory_space<vmem>>, vector<16x32xf32>,
    return
  }
  func.func @transform_0(%arg0: i32, %arg1: memref<1xf32, #tpu.memory_space<smem>>, %arg2: memref<1xf32, #tpu.memory_space<smem>>) -> (i32, i32) {
    %c0_i32 = arith.constant 0 : i32
    %c0_i32_0 = arith.constant 0 : i32
    return %arg0, %c0_i32 : i32, i32
  }
  func.func @transform_1(%arg0: i32, %arg1: memref<1xf32, #tpu.memory_space<smem>>, %arg2: memref<1xf32, #tpu.memory_space<smem>>) -> (i32, i32) {
    %c0_i32 = arith.constant 0 : i32
    %c0_i32_0 = arith.constant 0 : i32
    return %arg0, %c0_i32 : i32, i32
  }
}

</mosaic_0001>

<llo_original>
// kernel: tpu_custom_call.1
$region0: #{tpu_custom_call.1}
  #allocation0 [shape = 'u32[]', space=smem, size = 0x4, offset = 0x4, fixed_abs, tag = 'smem constant byte address 0x4 - core index']
  #allocation1 [shape = 'u32[144,128]{1,0:T(1,128)}', space=vmem, size = 0x12000, scoped, tag = 'internal scratch']
  #allocation2 [shape = 's32[1]{0}', space=sflag, size = 0x4, scoped, tag = 'scoped memory for tpu_custom_call.1']
  #allocation3 [shape = 'f32[1]{0:T(128)S(6)}', space=smem, size = 0x200, scoped, tag = 'prefetched SMEM operand 0']
  #allocation4 [shape = 'f32[1]{0:T(128)S(6)}', space=smem, size = 0x200, scoped, tag = 'prefetched SMEM operand 1']
  %s0 = inlined_call_operand.<no memory space> [shape: f32[1], index: 0, kind: input, shape index: {}]
  %s1 = inlined_call_operand.<no memory space> [shape: f32[1], index: 1, kind: input, shape index: {}]
  %s2 = inlined_call_operand.hbm [shape: f32[16,32], index: 2, kind: input, shape index: {}]
  %s3 = inlined_call_operand.hbm [shape: f32[16,32], index: 3, kind: output, shape index: {}]
  %s4 = sld [smem:[#allocation0]]
  $region18: #{tpu_custom_call.1} parent=0
    _
  %s6 = ssub.s32 1, %s4
  %s7 = scalar_select 0, %s6, %s4
  %8 = sst [smem:[#allocation3]] %s0
  %9 = sst [smem:[#allocation4]] %s1
  $region1: #{tpu_custom_call.1} parent=0
    #allocation5 [shape = 'u8[8192]{0}', space=vmem, size = 0x2000, scoped, tag = 'input window, operand 2, single buffered']
    #allocation6 [shape = 's32[1]{0}', space=sflag, size = 0x4, scoped, tag = 'scoped memory for tpu_custom_call.1']
    #allocation7 [shape = 's32[1]{0}', space=sflag, size = 0x4, scoped, tag = 'scoped memory for tpu_custom_call.1']
    #allocation8 [shape = 'u8[8192]{0}', space=vmem, size = 0x2000, scoped, tag = 'output window, operand 0, single buffered']
    %10 = vsyncpa [#allocation6], 0
    %11 = vsyncpa [#allocation7], 0
    // Predicated region
    $region2: #{tpu_custom_call.1} parent=1 // pred_check
      _
    $region3: #{tpu_custom_call.1} parent=1 // pred_check_branch
      %13 = sbr.rel (0) target = $region5
    $region4: #{tpu_custom_call.1} parent=1 // pred_region
      %s15 = ssub.s32 256, 256
      %16 = vsyncadd [#allocation6], %s15
      %s17 = sshll.u32 [#allocation5], 4
      %s18 = int_to_ptr.vmem [resolvable:$true] %s17
      %23 = dma.hbm_to_vmem [thread:$0]  %s2, 256, %s18, [#allocation6], 128, 128, 8
    $region5: #{tpu_custom_call.1} parent=1 // pred_fallthru
      _
    // Predicated region
    $region6: #{tpu_custom_call.1} parent=1 // pred_check
      _
    $region7: #{tpu_custom_call.1} parent=1 // pred_check_branch
      %25 = sbr.rel (0) target = $region9
    $region8: #{tpu_custom_call.1} parent=1 // pred_region
      %26 = dma.done [#allocation6], 256
    $region9: #{tpu_custom_call.1} parent=1 // pred_fallthru
      _
    %v27 = vld [vmem:[#allocation5] sm:$0xff]
    %v28 = vld [vmem:[#allocation5 + $0x8] sm:$0xff]
    %vm29 = vcmask 261120
    %v30 = vsel %vm29, %v27, 0.0
    %31 = vadd.xlane.f32.xlu0 %v30
    %v32 = vpop.xlane.xlu0 %31
    %v33 = vsel %vm29, %v28, 0.0
    %34 = vadd.xlane.f32.xlu0 %v33
    %v35 = vpop.xlane.xlu0 %34
    %v36 = vrcp.pop 32.0
    %v37 = vmul.f32 %v32, %v36
    %v38 = vmul.f32 %v35, %v36
    %v39 = vsub.f32 %v27, %v37
    %v40 = vsub.f32 %v28, %v38
    %v41 = vmul.f32 %v39, %v39
    %v42 = vmul.f32 %v40, %v40
    %v43 = vsel %vm29, %v41, 0.0
    %44 = vadd.xlane.f32.xlu0 %v43
    %v45 = vpop.xlane.xlu0 %44
    %v46 = vsel %vm29, %v42, 0.0
    %47 = vadd.xlane.f32.xlu0 %v46
    %v48 = vpop.xlane.xlu0 %47
    %v49 = vmul.f32 %v45, 0.032258064
    %v50 = vmul.f32 %v48, 0.032258064
    %v51 = vrsqrt.pop %v49
    %v52 = vmul.f32 %v49, %v51
    %vm53 = vcmp.eq.f32.partialorder %v49, inf
    %v54 = vsel %vm53, %v49, %v52
    %vm55 = vcmp.eq.f32.partialorder %v49, 0.0
    %v56 = vand.u32 %v49, 2147483648
    %v57 = vsel %vm55, %v56, %v54
    %v58 = vrsqrt.pop %v50
    %v59 = vmul.f32 %v50, %v58
    %vm60 = vcmp.eq.f32.partialorder %v50, inf
    %v61 = vsel %vm60, %v50, %v59
    %vm62 = vcmp.eq.f32.partialorder %v50, 0.0
    %v63 = vand.u32 %v50, 2147483648
    %v64 = vsel %vm62, %v63, %v61
    %v65 = vadd.f32 %v57, 1e-06
    %v66 = vadd.f32 %v64, 1e-06
    %v67 = vrcp.pop %v65
    %v68 = vrcp.pop %v66
    %s69 = sld [smem:[#allocation3]]
    %v70 = vstv %s69
    %v71 = vmul.f32 %v70, %v67
    %v72 = vmul.f32 %v70, %v68
    %v73 = vmul.f32 %v39, %v71
    %v74 = vmul.f32 %v40, %v72
    %s75 = sld [smem:[#allocation4]]
    %v76 = vstv %s75
    %v77 = vadd.f32 %v73, %v76
    %v78 = vadd.f32 %v74, %v76
    %79 = vst.msk [vmem:[#allocation8] sm:$0xff] %vm29, %v77
    %80 = vst.msk [vmem:[#allocation8 + $0x8] sm:$0xff] %vm29, %v78
    // Predicated region
    $region10: #{tpu_custom_call.1} parent=1 // pred_check
      _
    $region11: #{tpu_custom_call.1} parent=1 // pred_check_branch
      %82 = sbr.rel (0) target = $region13
    $region12: #{tpu_custom_call.1} parent=1 // pred_region
      %s84 = ssub.s32 256, 256
      %85 = vsyncadd [#allocation7], %s84
      %s86 = sshll.u32 [#allocation8], 4
      %s87 = int_to_ptr.vmem [resolvable:$true] %s86
      %92 = dma.vmem_to_hbm [thread:$0]  %s87, 256, %s3, [#allocation7], 128, 128, 8
    $region13: #{tpu_custom_call.1} parent=1 // pred_fallthru
      _
    // Predicated region
    $region14: #{tpu_custom_call.1} parent=1 // pred_check
      _
    $region15: #{tpu_custom_call.1} parent=1 // pred_check_branch
      %94 = sbr.rel (0) target = $region17
    $region16: #{tpu_custom_call.1} parent=1 // pred_region
      %95 = dma.done [#allocation7], 256
    $region17: #{tpu_custom_call.1} parent=1 // pred_fallthru
      _
    %96 = vsyncpa [#allocation6], 1
    %97 = vsyncpa [#allocation7], 1

</llo_original>
